<compile_context>
chip_gen: v7x
topology: tpu7x:2x2x1
jax: 0.10.0
libtpu: 0.0.40
codegen_flags: <defaults>
</compile_context>

<pallas_src>
import functools

import jax
import jax.numpy as jnp
from jax.experimental import pallas as pl
from jax.experimental.pallas import tpu as pltpu


_LEAKY_SLOPE = 0.2


def _round_up(v, m):
    return ((v + m - 1) // m) * m


def _pad2d(a, rows, cols):
    r, c = a.shape
    if r == rows and c == cols:
        return a
    return jnp.pad(a, ((0, rows - r), (0, cols - c)))


def _fused_gcn_kernel(x_ref, adj_ref, w1_ref, w2_ref, o_ref, h_ref):
    """out = LeakyReLU(adj @ (ReLU(LeakyReLU(adj @ (x @ W1))) @ W2))."""
    adj = adj_ref[...]

    # ---- layer 1 : gc1 --------------------------------------------------
    support1 = jnp.dot(x_ref[...], w1_ref[...],
                       preferred_element_type=jnp.float32)
    h = jnp.dot(adj, support1.astype(adj.dtype),
                preferred_element_type=jnp.float32)
    h = jnp.where(h >= 0, h, _LEAKY_SLOPE * h)   # LeakyReLU(0.2) inside gc1
    h = jnp.maximum(h, 0.0)                      # outer F.relu in GCN.forward
    # Hidden activation stays resident in VMEM (no HBM writeback / readback).
    h_ref[...] = h.astype(h_ref.dtype)

    # ---- layer 2 : gc2 --------------------------------------------------
    support2 = jnp.dot(h_ref[...], w2_ref[...],
                       preferred_element_type=jnp.float32)
    out = jnp.dot(adj, support2.astype(adj.dtype),
                  preferred_element_type=jnp.float32)
    out = jnp.where(out >= 0, out, _LEAKY_SLOPE * out)  # LeakyReLU(0.2) in gc2
    o_ref[...] = out.astype(o_ref.dtype)


@functools.partial(jax.jit, static_argnames=("compute_dtype",))
def gcn_forward(x, adj, w1, w2, *, compute_dtype=jnp.float32):
    """Two-layer GCN forward, fused into a single Pallas kernel."""
    n, nfeat = x.shape
    nhid = w1.shape[1]
    nclass = w2.shape[1]
    assert adj.shape == (n, n)
    assert w1.shape == (nfeat, nhid)
    assert w2.shape == (nhid, nclass)

    # Pad the node axis to the sublane multiple (8) and every feature axis to
    # the lane width (128) so all MXU operands / stores are lane-dense.
    n_p = _round_up(n, 8)
    f_p = _round_up(nfeat, 128)
    h_p = _round_up(nhid, 128)
    c_p = _round_up(nclass, 128)

    cdt = jnp.dtype(compute_dtype)
    x_p = _pad2d(x, n_p, f_p).astype(cdt)
    adj_p = _pad2d(adj, n_p, n_p).astype(cdt)
    w1_p = _pad2d(w1, f_p, h_p).astype(cdt)
    w2_p = _pad2d(w2, h_p, c_p).astype(cdt)

    # Everything (inputs + f32 output + VMEM scratch for h) must fit in VMEM.
    # Derive an explicit limit (with 2x headroom) so this stays safe on v7x.
    operand_bytes = (
        x_p.size * cdt.itemsize
        + adj_p.size * cdt.itemsize
        + w1_p.size * cdt.itemsize
        + w2_p.size * cdt.itemsize
        + n_p * c_p * 4            # f32 output
        + n_p * h_p * cdt.itemsize # h scratch
    )
    vmem_limit = int(min(32 * 1024 * 1024, max(1 << 20, 2 * operand_bytes)))

    out_p = pl.pallas_call(
        _fused_gcn_kernel,
        out_shape=jax.ShapeDtypeStruct((n_p, c_p), jnp.float32),
        grid=(1,),
        in_specs=[
            pl.BlockSpec((n_p, f_p), lambda i: (0, 0)),
            pl.BlockSpec((n_p, n_p), lambda i: (0, 0)),
            pl.BlockSpec((f_p, h_p), lambda i: (0, 0)),
            pl.BlockSpec((h_p, c_p), lambda i: (0, 0)),
        ],
        out_specs=pl.BlockSpec((n_p, c_p), lambda i: (0, 0)),
        scratch_shapes=[pltpu.VMEM((n_p, h_p), cdt)],
        compiler_params=pltpu.CompilerParams(
            dimension_semantics=("arbitrary",),
            vmem_limit_bytes=vmem_limit,
        ),
    )(x_p, adj_p, w1_p, w2_p)

    # Padded rows / columns are exactly zero; slice them away so they never
    # enter any downstream reduction (softmax / argmax / loss).
    return out_p[:n, :nclass]


def init_gcn_params(key, nfeat, nhid, nclass):
    """Matches GraphConvolution.reset_parameters:
    W ~ U(-stdv, stdv), stdv = 1/sqrt(out_features). No bias (bias=False)."""
    k1, k2 = jax.random.split(key)
    stdv1 = 1.0 / (nhid ** 0.5)
    stdv2 = 1.0 / (nclass ** 0.5)
    w1 = jax.random.uniform(k1, (nfeat, nhid), jnp.float32, -stdv1, stdv1)
    w2 = jax.random.uniform(k2, (nhid, nclass), jnp.float32, -stdv2, stdv2)
    return w1, w2


if __name__ == "__main__":
    # Small shapes consistent with the module's forward:
    #   N nodes = 8, nfeat = 16, nhid = 32, nclass = 8
    N, NFEAT, NHID, NCLASS = 8, 16, 32, 8

    key = jax.random.PRNGKey(0)
    kx, kadj, kparams = jax.random.split(key, 3)

    x = jax.random.normal(kx, (N, NFEAT), jnp.float32)
    # symmetric row-normalized dense adjacency (deterministic)
    a = jax.random.uniform(kadj, (N, N), jnp.float32)
    adj = (a + a.T) * 0.5
    adj = adj / jnp.sum(adj, axis=1, keepdims=True)

    w1, w2 = init_gcn_params(kparams, NFEAT, NHID, NCLASS)

    out = gcn_forward(x, adj, w1, w2)  # default f32 compute (matches torch)
    jax.block_until_ready(out)

    # Reference in plain JAX (same semantics, dropout = identity).
    def leaky(v):
        return jnp.where(v >= 0, v, _LEAKY_SLOPE * v)

    h_ref = jnp.maximum(leaky(adj @ (x @ w1)), 0.0)
    out_ref = leaky(adj @ (h_ref @ w2))

    assert out.shape == (N, NCLASS)
    assert jnp.allclose(out, out_ref, atol=1e-5, rtol=1e-5)

    print("KERNEL_OK")
</pallas_src>

<mosaic_0001>
module attributes {stable_mosaic.version = 11 : i64} {
  func.func @_fused_gcn_kernel(%arg0: i32, %arg1: memref<8x128xf32, #tpu.memory_space<vmem>>, %arg2: memref<8x8xf32, #tpu.memory_space<vmem>>, %arg3: memref<128x128xf32, #tpu.memory_space<vmem>>, %arg4: memref<128x128xf32, #tpu.memory_space<vmem>>, %arg5: memref<8x128xf32, #tpu.memory_space<vmem>>, %arg6: memref<8x128xf32, #tpu.memory_space<vmem>>) attributes {dimension_semantics = [#tpu.dimension_semantics<arbitrary>], iteration_bounds = array<i64: 1>, scalar_prefetch = 0 : i64, scratch_operands = 1 : i64, tpu.core_type = #tpu.core_type<tc>, window_params = [{pipeline_mode = #tpu.pipeline_mode<synchronous>, transform_indices = @transform_0, window_bounds = array<i64: 8, 128>}, {pipeline_mode = #tpu.pipeline_mode<synchronous>, transform_indices = @transform_1, window_bounds = array<i64: 8, 8>}, {pipeline_mode = #tpu.pipeline_mode<synchronous>, transform_indices = @transform_2, window_bounds = array<i64: 128, 128>}, {pipeline_mode = #tpu.pipeline_mode<synchronous>, transform_indices = @transform_3, window_bounds = array<i64: 128, 128>}, {pipeline_mode = #tpu.pipeline_mode<synchronous>, transform_indices = @transform_4, window_bounds = array<i64: 8, 128>}]} {
    %c0 = arith.constant 0 : index
    %c0_0 = arith.constant 0 : index
    %0 = vector.load %arg2[%c0, %c0_0] : memref<8x8xf32, #tpu.memory_space<vmem>>, vector<8x8xf32>
    %c0_1 = arith.constant 0 : index
    %c0_2 = arith.constant 0 : index
    %1 = vector.load %arg1[%c0_1, %c0_2] : memref<8x128xf32, #tpu.memory_space<vmem>>, vector<8x128xf32>
    %c0_3 = arith.constant 0 : index
    %c0_4 = arith.constant 0 : index
    %2 = vector.load %arg3[%c0_3, %c0_4] : memref<128x128xf32, #tpu.memory_space<vmem>>, vector<128x128xf32>
    %cst = arith.constant dense<0.000000e+00> : vector<8x128xf32>
    %3 = tpu.matmul %1, %2, %cst {dimension_numbers = #tpu.dot_dimension_numbers<[1], [0], [0], [1], [0, 0, 1, 1], [], []>} : vector<8x128xf32>, vector<128x128xf32>, vector<8x128xf32> -> vector<8x128xf32>
    %cst_5 = arith.constant dense<0.000000e+00> : vector<8x128xf32>
    %4 = tpu.matmul %0, %3, %cst_5 {dimension_numbers = #tpu.dot_dimension_numbers<[1], [0], [0], [1], [0, 0, 1, 1], [], []>} : vector<8x8xf32>, vector<8x128xf32>, vector<8x128xf32> -> vector<8x128xf32>
    %cst_6 = arith.constant 0.000000e+00 : f32
    %5 = vector.broadcast %cst_6 : f32 to vector<8x128xf32>
    %6 = arith.cmpf oge, %4, %5 : vector<8x128xf32>
    %cst_7 = arith.constant 2.000000e-01 : f32
    %7 = vector.broadcast %cst_7 : f32 to vector<8x128xf32>
    %8 = arith.mulf %7, %4 : vector<8x128xf32>
    %9 = arith.select %6, %4, %8 : vector<8x128xi1>, vector<8x128xf32>
    %cst_8 = arith.constant 0.000000e+00 : f32
    %10 = vector.broadcast %cst_8 : f32 to vector<8x128xf32>
    %11 = arith.maximumf %9, %10 : vector<8x128xf32>
    %c0_9 = arith.constant 0 : index
    %c0_10 = arith.constant 0 : index
    %12 = vector.load %arg6[%c0_9, %c0_10] : memref<8x128xf32, #tpu.memory_space<vmem>>, vector<8x128xf32>
    tpu.vector_store %arg6[%c0_9, %c0_10], %11 {strides = array<i32>} : memref<8x128xf32, #tpu.memory_space<vmem>>, vector<8x128xf32>,
    %c0_11 = arith.constant 0 : index
    %c0_12 = arith.constant 0 : index
    %13 = vector.load %arg6[%c0_11, %c0_12] : memref<8x128xf32, #tpu.memory_space<vmem>>, vector<8x128xf32>
    %c0_13 = arith.constant 0 : index
    %c0_14 = arith.constant 0 : index
    %14 = vector.load %arg4[%c0_13, %c0_14] : memref<128x128xf32, #tpu.memory_space<vmem>>, vector<128x128xf32>
    %cst_15 = arith.constant dense<0.000000e+00> : vector<8x128xf32>
    %15 = tpu.matmul %13, %14, %cst_15 {dimension_numbers = #tpu.dot_dimension_numbers<[1], [0], [0], [1], [0, 0, 1, 1], [], []>} : vector<8x128xf32>, vector<128x128xf32>, vector<8x128xf32> -> vector<8x128xf32>
    %cst_16 = arith.constant dense<0.000000e+00> : vector<8x128xf32>
    %16 = tpu.matmul %0, %15, %cst_16 {dimension_numbers = #tpu.dot_dimension_numbers<[1], [0], [0], [1], [0, 0, 1, 1], [], []>} : vector<8x8xf32>, vector<8x128xf32>, vector<8x128xf32> -> vector<8x128xf32>
    %cst_17 = arith.constant 0.000000e+00 : f32
    %17 = vector.broadcast %cst_17 : f32 to vector<8x128xf32>
    %18 = arith.cmpf oge, %16, %17 : vector<8x128xf32>
    %cst_18 = arith.constant 2.000000e-01 : f32
    %19 = vector.broadcast %cst_18 : f32 to vector<8x128xf32>
    %20 = arith.mulf %19, %16 : vector<8x128xf32>
    %21 = arith.select %18, %16, %20 : vector<8x128xi1>, vector<8x128xf32>
    %c0_19 = arith.constant 0 : index
    %c0_20 = arith.constant 0 : index
    %22 = vector.load %arg5[%c0_19, %c0_20] : memref<8x128xf32, #tpu.memory_space<vmem>>, vector<8x128xf32>
    tpu.vector_store %arg5[%c0_19, %c0_20], %21 {strides = array<i32>} : memref<8x128xf32, #tpu.memory_space<vmem>>, vector<8x128xf32>,
    return
  }
  func.func @transform_0(%arg0: i32) -> (i32, i32) {
    %c0_i32 = arith.constant 0 : i32
    %c0_i32_0 = arith.constant 0 : i32
    %c0_i32_1 = arith.constant 0 : i32
    return %c0_i32, %c0_i32_0 : i32, i32
  }
  func.func @transform_1(%arg0: i32) -> (i32, i32) {
    %c0_i32 = arith.constant 0 : i32
    %c0_i32_0 = arith.constant 0 : i32
    %c0_i32_1 = arith.constant 0 : i32
    return %c0_i32, %c0_i32_0 : i32, i32
  }
  func.func @transform_2(%arg0: i32) -> (i32, i32) {
    %c0_i32 = arith.constant 0 : i32
    %c0_i32_0 = arith.constant 0 : i32
    %c0_i32_1 = arith.constant 0 : i32
    return %c0_i32, %c0_i32_0 : i32, i32
  }
  func.func @transform_3(%arg0: i32) -> (i32, i32) {
    %c0_i32 = arith.constant 0 : i32
    %c0_i32_0 = arith.constant 0 : i32
    %c0_i32_1 = arith.constant 0 : i32
    return %c0_i32, %c0_i32_0 : i32, i32
  }
  func.func @transform_4(%arg0: i32) -> (i32, i32) {
    %c0_i32 = arith.constant 0 : i32
    %c0_i32_0 = arith.constant 0 : i32
    %c0_i32_1 = arith.constant 0 : i32
    return %c0_i32, %c0_i32_0 : i32, i32
  }
}

</mosaic_0001>

<llo_original>
// kernel: gcn_forward.1
$region0: #{gcn_forward.1}
  #allocation0 [shape = 'u32[]', space=smem, size = 0x4, offset = 0x4, fixed_abs, tag = 'smem constant byte address 0x4 - core index']
  #allocation1 [shape = 'u32[144,128]{1,0:T(1,128)}', space=vmem, size = 0x12000, scoped, tag = 'internal scratch']
  #allocation2 [shape = 'f32[8,128]{1,0:T(8,128)}', space=vmem, size = 0x1000, scoped, tag = 'scratch operand']
  %s0 = inlined_call_operand.vmem [shape: f32[8,128], index: 0, kind: input, shape index: {}]
  %s1 = inlined_call_operand.vmem [shape: f32[8,8], index: 1, kind: input, shape index: {}]
  %s2 = inlined_call_operand.vmem [shape: f32[128,128], index: 2, kind: input, shape index: {}]
  %s3 = inlined_call_operand.vmem [shape: f32[128,128], index: 3, kind: input, shape index: {}]
  %s4 = inlined_call_operand.hbm [shape: f32[8,128], index: 4, kind: output, shape index: {}]
  %s5 = sld [smem:[#allocation0]]
  $region26: #{gcn_forward.1} parent=0
    _
  %s7 = ssub.s32 1, %s5
  %s8 = scalar_select 0, %s7, %s5
  $region1: #{gcn_forward.1} parent=0
    #allocation3 [shape = 'u8[4096]{0}', space=vmem, size = 0x1000, scoped, tag = 'output window, operand 0, single buffered']
    #allocation4 [shape = 's32[1]{0}', space=sflag, size = 0x4, scoped, tag = 'scoped memory for gcn_forward.1']
    %9 = vsyncpa [#allocation4], 0
    // Predicated region
    $region2: #{gcn_forward.1} parent=1 // pred_check
      _
    $region3: #{gcn_forward.1} parent=1 // pred_check_branch
      %11 = sbr.rel (0) target = $region5
    $region4: #{gcn_forward.1} parent=1 // pred_region
      _
    $region5: #{gcn_forward.1} parent=1 // pred_fallthru
      _
    // Predicated region
    $region6: #{gcn_forward.1} parent=1 // pred_check
      _
    $region7: #{gcn_forward.1} parent=1 // pred_check_branch
      %13 = sbr.rel (0) target = $region9
    $region8: #{gcn_forward.1} parent=1 // pred_region
      _
    $region9: #{gcn_forward.1} parent=1 // pred_fallthru
      _
    // Predicated region
    $region10: #{gcn_forward.1} parent=1 // pred_check
      _
    $region11: #{gcn_forward.1} parent=1 // pred_check_branch
      %15 = sbr.rel (0) target = $region13
    $region12: #{gcn_forward.1} parent=1 // pred_region
      _
    $region13: #{gcn_forward.1} parent=1 // pred_fallthru
      _
    // Predicated region
    $region14: #{gcn_forward.1} parent=1 // pred_check
      _
    $region15: #{gcn_forward.1} parent=1 // pred_check_branch
      %17 = sbr.rel (0) target = $region17
    $region16: #{gcn_forward.1} parent=1 // pred_region
      _
    $region17: #{gcn_forward.1} parent=1 // pred_fallthru
      _
    %v18 = vld [vmem:[%s1] sm:$0xff]
    %v19 = vld [vmem:[%s0] sm:$0xff]
    %v20 = vld [vmem:[%s2] sm:$0xff]
    %v21 = vld [vmem:[%s2 + $0x8] sm:$0xff]
    %v22 = vld [vmem:[%s2 + $0x10] sm:$0xff]
    %v23 = vld [vmem:[%s2 + $0x18] sm:$0xff]
    %v24 = vld [vmem:[%s2 + $0x20] sm:$0xff]
    %v25 = vld [vmem:[%s2 + $0x28] sm:$0xff]
    %v26 = vld [vmem:[%s2 + $0x30] sm:$0xff]
    %v27 = vld [vmem:[%s2 + $0x38] sm:$0xff]
    %v28 = vld [vmem:[%s2 + $0x40] sm:$0xff]
    %v29 = vld [vmem:[%s2 + $0x48] sm:$0xff]
    %v30 = vld [vmem:[%s2 + $0x50] sm:$0xff]
    %v31 = vld [vmem:[%s2 + $0x58] sm:$0xff]
    %v32 = vld [vmem:[%s2 + $0x60] sm:$0xff]
    %v33 = vld [vmem:[%s2 + $0x68] sm:$0xff]
    %v34 = vld [vmem:[%s2 + $0x70] sm:$0xff]
    %v35 = vld [vmem:[%s2 + $0x78] sm:$0xff]
    %36 = vmatprep.subr.mxu0 0.0
    %37 = vmatpush1.msra.mxu0 %v20
    %38 = vmatprep.subr.mxu0 0.0
    %39 = vmatpush1.msra.mxu0 %v21
    %40 = vmatprep.subr.mxu0 0.0
    %41 = vmatpush1.msra.mxu0 %v22
    %42 = vmatprep.subr.mxu0 0.0
    %43 = vmatpush1.msra.mxu0 %v23
    %44 = vmatprep.subr.mxu0 0.0
    %45 = vmatpush1.msra.mxu0 %v24
    %46 = vmatprep.subr.mxu0 0.0
    %47 = vmatpush1.msra.mxu0 %v25
    %48 = vmatprep.subr.mxu0 0.0
    %49 = vmatpush1.msra.mxu0 %v26
    %50 = vmatprep.subr.mxu0 0.0
    %51 = vmatpush1.msra.mxu0 %v27
    %52 = vmatprep.subr.mxu0 0.0
    %53 = vmatpush1.msra.mxu0 %v28
    %54 = vmatprep.subr.mxu0 0.0
    %55 = vmatpush1.msra.mxu0 %v29
    %56 = vmatprep.subr.mxu0 0.0
    %57 = vmatpush1.msra.mxu0 %v30
    %58 = vmatprep.subr.mxu0 0.0
    %59 = vmatpush1.msra.mxu0 %v31
    %60 = vmatprep.subr.mxu0 0.0
    %61 = vmatpush1.msra.mxu0 %v32
    %62 = vmatprep.subr.mxu0 0.0
    %63 = vmatpush1.msra.mxu0 %v33
    %64 = vmatprep.subr.mxu0 0.0
    %65 = vmatpush1.msra.mxu0 %v34
    %66 = vmatprep.subr.mxu0 0.0
    %67 = vmatpush1.msra.mxu0 %v35
    %68 = vmatprep.subr.mxu0 0.0
    %69 = vmatpush1.msra.mxu0 0.0
    %70 = vmatprep.subr.mxu0 0.0
    %71 = vmatpush1.msra.mxu0 0.0
    %72 = vmatprep.subr.mxu0 0.0
    %73 = vmatpush1.msra.mxu0 0.0
    %74 = vmatprep.subr.mxu0 0.0
    %75 = vmatpush1.msra.mxu0 0.0
    %76 = vmatprep.subr.mxu0 0.0
    %77 = vmatpush1.msra.mxu0 0.0
    %78 = vmatprep.subr.mxu0 0.0
    %79 = vmatpush1.msra.mxu0 0.0
    %80 = vmatprep.subr.mxu0 0.0
    %81 = vmatpush1.msra.mxu0 0.0
    %82 = vmatprep.subr.mxu0 0.0
    %83 = vmatpush1.msra.mxu0 0.0
    %84 = vmatprep.subr.mxu0 0.0
    %85 = vmatpush1.msra.mxu0 0.0
    %86 = vmatprep.subr.mxu0 0.0
    %87 = vmatpush1.msra.mxu0 0.0
    %88 = vmatprep.subr.mxu0 0.0
    %89 = vmatpush1.msra.mxu0 0.0
    %90 = vmatprep.subr.mxu0 0.0
    %91 = vmatpush1.msra.mxu0 0.0
    %92 = vmatprep.subr.mxu0 0.0
    %93 = vmatpush1.msra.mxu0 0.0
    %94 = vmatprep.subr.mxu0 0.0
    %95 = vmatpush1.msra.mxu0 0.0
    %96 = vmatprep.subr.mxu0 0.0
    %97 = vmatpush1.msra.mxu0 0.0
    %98 = vmatprep.subr.mxu0 0.0
    %99 = vmatpush1.msra.mxu0 0.0
    %100 = vmatprep.mubr.f32.mxu0 0.0
    %101 = vmatmul.mubr.f32.gmra.mrb[0].mxu0 %v19
    %v102 = vpop.f32.mrb[0].mxu0
    %v103 = vadd.f32 0.0, %v102
    %v104 = vpop.f32.mrb[0].mxu0
    %105 = vdwg.mxu0
    %vm106 = vcmask 64512
    %v108 = vsel %vm106, %v18, 0
    %110 = vmatprep.subr.mxu0 0.0
    %111 = vmatpush1.msra.mxu0 %v103
    %112 = vmatprep.subr.mxu0 0.0
    %113 = vmatpush1.msra.mxu0 0.0
    %114 = vmatprep.subr.mxu0 0.0
    %115 = vmatpush1.msra.mxu0 0.0
    %116 = vmatprep.subr.mxu0 0.0
    %117 = vmatpush1.msra.mxu0 0.0
    %118 = vmatprep.subr.mxu0 0.0
    %119 = vmatpush1.msra.mxu0 0.0
    %120 = vmatprep.subr.mxu0 0.0
    %121 = vmatpush1.msra.mxu0 0.0
    %122 = vmatprep.subr.mxu0 0.0
    %123 = vmatpush1.msra.mxu0 0.0
    %124 = vmatprep.subr.mxu0 0.0
    %125 = vmatpush1.msra.mxu0 0.0
    %126 = vmatprep.subr.mxu0 0.0
    %127 = vmatpush1.msra.mxu0 0.0
    %128 = vmatprep.subr.mxu0 0.0
    %129 = vmatpush1.msra.mxu0 0.0
    %130 = vmatprep.subr.mxu0 0.0
    %131 = vmatpush1.msra.mxu0 0.0
    %132 = vmatprep.subr.mxu0 0.0
    %133 = vmatpush1.msra.mxu0 0.0
    %134 = vmatprep.subr.mxu0 0.0
    %135 = vmatpush1.msra.mxu0 0.0
    %136 = vmatprep.subr.mxu0 0.0
    %137 = vmatpush1.msra.mxu0 0.0
    %138 = vmatprep.subr.mxu0 0.0
    %139 = vmatpush1.msra.mxu0 0.0
    %140 = vmatprep.subr.mxu0 0.0
    %141 = vmatpush1.msra.mxu0 0.0
    %142 = vmatprep.subr.mxu0 0.0
    %143 = vmatpush1.msra.mxu0 0.0
    %144 = vmatprep.subr.mxu0 0.0
    %145 = vmatpush1.msra.mxu0 0.0
    %146 = vmatprep.subr.mxu0 0.0
    %147 = vmatpush1.msra.mxu0 0.0
    %148 = vmatprep.subr.mxu0 0.0
    %149 = vmatpush1.msra.mxu0 0.0
    %150 = vmatprep.subr.mxu0 0.0
    %151 = vmatpush1.msra.mxu0 0.0
    %152 = vmatprep.subr.mxu0 0.0
    %153 = vmatpush1.msra.mxu0 0.0
    %154 = vmatprep.subr.mxu0 0.0
    %155 = vmatpush1.msra.mxu0 0.0
    %156 = vmatprep.subr.mxu0 0.0
    %157 = vmatpush1.msra.mxu0 0.0
    %158 = vmatprep.subr.mxu0 0.0
    %159 = vmatpush1.msra.mxu0 0.0
    %160 = vmatprep.subr.mxu0 0.0
    %161 = vmatpush1.msra.mxu0 0.0
    %162 = vmatprep.subr.mxu0 0.0
    %163 = vmatpush1.msra.mxu0 0.0
    %164 = vmatprep.subr.mxu0 0.0
    %165 = vmatpush1.msra.mxu0 0.0
    %166 = vmatprep.subr.mxu0 0.0
    %167 = vmatpush1.msra.mxu0 0.0
    %168 = vmatprep.subr.mxu0 0.0
    %169 = vmatpush1.msra.mxu0 0.0
    %170 = vmatprep.subr.mxu0 0.0
    %171 = vmatpush1.msra.mxu0 0.0
    %172 = vmatprep.subr.mxu0 0.0
    %173 = vmatpush1.msra.mxu0 0.0
    %174 = vmatprep.mubr.f32.mxu0 0.0
    %175 = vmatmul.mubr.f32.gmra.mrb[0].mxu0 %v108
    %v176 = vpop.f32.mrb[0].mxu0
    %v177 = vadd.f32 0.0, %v176
    %v178 = vpop.f32.mrb[0].mxu0
    %179 = vdwg.mxu0
    %vm180 = vcmp.ge.f32.partialorder %v177, 0.0
    %v181 = vmul.f32 %v177, 0.2
    %v182 = vsel %vm180, %v177, %v181
    %v183 = vmax.f32 %v182, 0.0
    %184 = vst [vmem:[#allocation2] sm:$0xff] %v183
    %v185 = vld [vmem:[#allocation2] sm:$0xff]
    %v186 = vld [vmem:[%s3] sm:$0xff]
    %v187 = vld [vmem:[%s3 + $0x8] sm:$0xff]
    %v188 = vld [vmem:[%s3 + $0x10] sm:$0xff]
    %v189 = vld [vmem:[%s3 + $0x18] sm:$0xff]
    %v190 = vld [vmem:[%s3 + $0x20] sm:$0xff]
    %v191 = vld [vmem:[%s3 + $0x28] sm:$0xff]
    %v192 = vld [vmem:[%s3 + $0x30] sm:$0xff]
    %v193 = vld [vmem:[%s3 + $0x38] sm:$0xff]
    %v194 = vld [vmem:[%s3 + $0x40] sm:$0xff]
    %v195 = vld [vmem:[%s3 + $0x48] sm:$0xff]
    %v196 = vld [vmem:[%s3 + $0x50] sm:$0xff]
    %v197 = vld [vmem:[%s3 + $0x58] sm:$0xff]
    %v198 = vld [vmem:[%s3 + $0x60] sm:$0xff]
    %v199 = vld [vmem:[%s3 + $0x68] sm:$0xff]
    %v200 = vld [vmem:[%s3 + $0x70] sm:$0xff]
    %v201 = vld [vmem:[%s3 + $0x78] sm:$0xff]
    %202 = vmatprep.subr.mxu0 0.0
    %203 = vmatpush1.msra.mxu0 %v186
    %204 = vmatprep.subr.mxu0 0.0
    %205 = vmatpush1.msra.mxu0 %v187
    %206 = vmatprep.subr.mxu0 0.0
    %207 = vmatpush1.msra.mxu0 %v188
    %208 = vmatprep.subr.mxu0 0.0
    %209 = vmatpush1.msra.mxu0 %v189
    %210 = vmatprep.subr.mxu0 0.0
    %211 = vmatpush1.msra.mxu0 %v190
    %212 = vmatprep.subr.mxu0 0.0
    %213 = vmatpush1.msra.mxu0 %v191
    %214 = vmatprep.subr.mxu0 0.0
    %215 = vmatpush1.msra.mxu0 %v192
    %216 = vmatprep.subr.mxu0 0.0
    %217 = vmatpush1.msra.mxu0 %v193
    %218 = vmatprep.subr.mxu0 0.0
    %219 = vmatpush1.msra.mxu0 %v194
    %220 = vmatprep.subr.mxu0 0.0
    %221 = vmatpush1.msra.mxu0 %v195
    %222 = vmatprep.subr.mxu0 0.0
    %223 = vmatpush1.msra.mxu0 %v196
    %224 = vmatprep.subr.mxu0 0.0
    %225 = vmatpush1.msra.mxu0 %v197
    %226 = vmatprep.subr.mxu0 0.0
    %227 = vmatpush1.msra.mxu0 %v198
    %228 = vmatprep.subr.mxu0 0.0
    %229 = vmatpush1.msra.mxu0 %v199
    %230 = vmatprep.subr.mxu0 0.0
    %231 = vmatpush1.msra.mxu0 %v200
    %232 = vmatprep.subr.mxu0 0.0
    %233 = vmatpush1.msra.mxu0 %v201
    %234 = vmatprep.subr.mxu0 0.0
    %235 = vmatpush1.msra.mxu0 0.0
    %236 = vmatprep.subr.mxu0 0.0
    %237 = vmatpush1.msra.mxu0 0.0
    %238 = vmatprep.subr.mxu0 0.0
    %239 = vmatpush1.msra.mxu0 0.0
    %240 = vmatprep.subr.mxu0 0.0
    %241 = vmatpush1.msra.mxu0 0.0
    %242 = vmatprep.subr.mxu0 0.0
    %243 = vmatpush1.msra.mxu0 0.0
    %244 = vmatprep.subr.mxu0 0.0
    %245 = vmatpush1.msra.mxu0 0.0
    %246 = vmatprep.subr.mxu0 0.0
    %247 = vmatpush1.msra.mxu0 0.0
    %248 = vmatprep.subr.mxu0 0.0
    %249 = vmatpush1.msra.mxu0 0.0
    %250 = vmatprep.subr.mxu0 0.0
    %251 = vmatpush1.msra.mxu0 0.0
    %252 = vmatprep.subr.mxu0 0.0
    %253 = vmatpush1.msra.mxu0 0.0
    %254 = vmatprep.subr.mxu0 0.0
    %255 = vmatpush1.msra.mxu0 0.0
    %256 = vmatprep.subr.mxu0 0.0
    %257 = vmatpush1.msra.mxu0 0.0
    %258 = vmatprep.subr.mxu0 0.0
    %259 = vmatpush1.msra.mxu0 0.0
    %260 = vmatprep.subr.mxu0 0.0
    %261 = vmatpush1.msra.mxu0 0.0
    %262 = vmatprep.subr.mxu0 0.0
    %263 = vmatpush1.msra.mxu0 0.0
    %264 = vmatprep.subr.mxu0 0.0
    %265 = vmatpush1.msra.mxu0 0.0
    %266 = vmatprep.mubr.f32.mxu0 0.0
    %267 = vmatmul.mubr.f32.gmra.mrb[0].mxu0 %v185
    %v268 = vpop.f32.mrb[0].mxu0
    %v269 = vadd.f32 0.0, %v268
    %v270 = vpop.f32.mrb[0].mxu0
    %271 = vdwg.mxu0
    %272 = vmatprep.subr.mxu0 0.0
    %273 = vmatpush1.msra.mxu0 %v269
    %274 = vmatprep.subr.mxu0 0.0
    %275 = vmatpush1.msra.mxu0 0.0
    %276 = vmatprep.subr.mxu0 0.0
    %277 = vmatpush1.msra.mxu0 0.0
    %278 = vmatprep.subr.mxu0 0.0
    %279 = vmatpush1.msra.mxu0 0.0
    %280 = vmatprep.subr.mxu0 0.0
    %281 = vmatpush1.msra.mxu0 0.0
    %282 = vmatprep.subr.mxu0 0.0
    %283 = vmatpush1.msra.mxu0 0.0
    %284 = vmatprep.subr.mxu0 0.0
    %285 = vmatpush1.msra.mxu0 0.0
    %286 = vmatprep.subr.mxu0 0.0
    %287 = vmatpush1.msra.mxu0 0.0
    %288 = vmatprep.subr.mxu0 0.0
    %289 = vmatpush1.msra.mxu0 0.0
    %290 = vmatprep.subr.mxu0 0.0
    %291 = vmatpush1.msra.mxu0 0.0
    %292 = vmatprep.subr.mxu0 0.0
    %293 = vmatpush1.msra.mxu0 0.0
    %294 = vmatprep.subr.mxu0 0.0
    %295 = vmatpush1.msra.mxu0 0.0
    %296 = vmatprep.subr.mxu0 0.0
    %297 = vmatpush1.msra.mxu0 0.0
    %298 = vmatprep.subr.mxu0 0.0
    %299 = vmatpush1.msra.mxu0 0.0
    %300 = vmatprep.subr.mxu0 0.0
    %301 = vmatpush1.msra.mxu0 0.0
    %302 = vmatprep.subr.mxu0 0.0
    %303 = vmatpush1.msra.mxu0 0.0
    %304 = vmatprep.subr.mxu0 0.0
    %305 = vmatpush1.msra.mxu0 0.0
    %306 = vmatprep.subr.mxu0 0.0
    %307 = vmatpush1.msra.mxu0 0.0
    %308 = vmatprep.subr.mxu0 0.0
    %309 = vmatpush1.msra.mxu0 0.0
    %310 = vmatprep.subr.mxu0 0.0
    %311 = vmatpush1.msra.mxu0 0.0
    %312 = vmatprep.subr.mxu0 0.0
    %313 = vmatpush1.msra.mxu0 0.0
    %314 = vmatprep.subr.mxu0 0.0
    %315 = vmatpush1.msra.mxu0 0.0
    %316 = vmatprep.subr.mxu0 0.0
    %317 = vmatpush1.msra.mxu0 0.0
    %318 = vmatprep.subr.mxu0 0.0
    %319 = vmatpush1.msra.mxu0 0.0
    %320 = vmatprep.subr.mxu0 0.0
    %321 = vmatpush1.msra.mxu0 0.0
    %322 = vmatprep.subr.mxu0 0.0
    %323 = vmatpush1.msra.mxu0 0.0
    %324 = vmatprep.subr.mxu0 0.0
    %325 = vmatpush1.msra.mxu0 0.0
    %326 = vmatprep.subr.mxu0 0.0
    %327 = vmatpush1.msra.mxu0 0.0
    %328 = vmatprep.subr.mxu0 0.0
    %329 = vmatpush1.msra.mxu0 0.0
    %330 = vmatprep.subr.mxu0 0.0
    %331 = vmatpush1.msra.mxu0 0.0
    %332 = vmatprep.subr.mxu0 0.0
    %333 = vmatpush1.msra.mxu0 0.0
    %334 = vmatprep.subr.mxu0 0.0
    %335 = vmatpush1.msra.mxu0 0.0
    %336 = vmatprep.mubr.f32.mxu0 0.0
    %337 = vmatmul.mubr.f32.gmra.mrb[0].mxu0 %v108
    %v338 = vpop.f32.mrb[0].mxu0
    %v339 = vadd.f32 0.0, %v338
    %v340 = vpop.f32.mrb[0].mxu0
    %341 = vdwg.mxu0
    %vm342 = vcmp.ge.f32.partialorder %v339, 0.0
    %v343 = vmul.f32 %v339, 0.2
    %v344 = vsel %vm342, %v339, %v343
    %345 = vst [vmem:[#allocation3] sm:$0xff] %v344
    // Predicated region
    $region18: #{gcn_forward.1} parent=1 // pred_check
      _
    $region19: #{gcn_forward.1} parent=1 // pred_check_branch
      %347 = sbr.rel (0) target = $region21
    $region20: #{gcn_forward.1} parent=1 // pred_region
      %s349 = ssub.s32 128, 128
      %350 = vsyncadd [#allocation4], %s349
      %s352 = sshll.u32 [#allocation3], 4
      %s353 = int_to_ptr.vmem [resolvable:$true] %s352
      %355 = dma.vmem_to_hbm [thread:$0]  %s353, 128, %s4, [#allocation4]
    $region21: #{gcn_forward.1} parent=1 // pred_fallthru
      _
    // Predicated region
    $region22: #{gcn_forward.1} parent=1 // pred_check
      _
    $region23: #{gcn_forward.1} parent=1 // pred_check_branch
      %357 = sbr.rel (0) target = $region25
    $region24: #{gcn_forward.1} parent=1 // pred_region
      %358 = dma.done [#allocation4], 128
    $region25: #{gcn_forward.1} parent=1 // pred_fallthru
      _
    %359 = vsyncpa [#allocation4], 1

</llo_original>
